<compile_context>
chip_gen: v7x
topology: tpu7x:2x2x1
jax: 0.10.0
libtpu: 0.0.40
codegen_flags: <defaults>
</compile_context>

<pallas_src>
import functools

import jax
import jax.numpy as jnp
import numpy as np
from jax.experimental import pallas as pl
from jax.experimental.pallas import tpu as pltpu

N_NODES = 22   # module default
K_HOPS = 2     # module default k=2


def edge_weight_kernel(a_ref, ew_ref, wk_ref):
    """Single invocation (no grid): normalized edge_weight and its K-hop power.

    a_ref : (N, N) symmetric adjacency with self-loops (A_lower + A_lower.T + I)
    ew_ref: (N, N) normalized edge_weight returned by the module
    wk_ref: (N, N) edge_weight^K, used by the propagation kernel
    """
    a = a_ref[...].astype(jnp.float32)                       # (N, N)

    # TODO(synk): normalize() is undefined in the provided snippet; using the
    # standard symmetric GCN normalization D^{-1/2} A D^{-1/2} (no eps clamp).
    deg_row = jnp.sum(a, axis=1, keepdims=True)              # (N, 1)
    deg_col = jnp.sum(a, axis=0, keepdims=True)              # (1, N)
    a_norm = jax.lax.rsqrt(deg_row) * a * jax.lax.rsqrt(deg_col)

    ew = a_norm + jnp.eye(N_NODES, dtype=jnp.float32)        # normalize(A) + I
    ew_ref[...] = ew

    w = ew
    for _ in range(K_HOPS - 1):                              # W^K, 22x22 -> tiny
        w = jnp.dot(w, ew, preferred_element_type=jnp.float32)
    wk_ref[...] = w


def _compute_edge_weights(a_sym):
    N = N_NODES
    return pl.pallas_call(
        edge_weight_kernel,
        out_shape=(
            jax.ShapeDtypeStruct((N, N), jnp.float32),
            jax.ShapeDtypeStruct((N, N), jnp.float32),
        ),
        in_specs=[pl.BlockSpec(memory_space=pltpu.MemorySpace.VMEM)],
        out_specs=(
            pl.BlockSpec(memory_space=pltpu.MemorySpace.VMEM),
            pl.BlockSpec(memory_space=pltpu.MemorySpace.VMEM),
        ),
    )(a_sym)


def propagate_kernel(wk_ref, x_ref, y_ref, *, n_channels, seq_len):
    """One batch element.

    wk_ref: (N, N)              W^K
    x_ref : (1, C, N, T)        natural input layout (batch block)
    y_ref : (1, N, C*T)         module output layout (permute+view fused here)

    y[n, c*T + t] = sum_m W^K[n, m] * x[c, m, t]
    i.e. one small MXU matmul per channel; each (m, t) slice of x is already in
    MXU rhs layout (sublane = nodes, lane = time), so no in-kernel relayout of
    the inputs is needed.  The per-channel results are concatenated along the
    lane axis and stored with a single full-width store.
    """
    w = wk_ref[...]                                           # (N, N) f32
    xb = x_ref[0]                                             # (C, N, T)
    outs = []
    for c in range(n_channels):                               # static unroll
        outs.append(
            jnp.dot(w, xb[c], preferred_element_type=jnp.float32)  # (N, T)
        )
    y_ref[0] = jnp.concatenate(outs, axis=-1).astype(y_ref.dtype)  # (N, C*T)


def spatial_graph_forward(x, edge_weight_param, spatial_GCN=True):
    """x: (B, C, n_nodes, T); edge_weight_param: strictly-lower-tri entries.

    Returns (y, edge_weight) matching the PyTorch module's forward:
      y has shape (B, n_nodes, C*T) == x.permute(0,2,1,3).view(B, n_nodes, -1)
      propagated K_HOPS times by edge_weight.
    """
    B, C, N, T = x.shape
    assert N == N_NODES

    if spatial_GCN:
        xs, ys = jnp.tril_indices(N, k=-1)
        a_lower = jnp.zeros((N, N), jnp.float32).at[xs, ys].set(
            edge_weight_param.astype(jnp.float32))
        a_sym = a_lower + a_lower.T + jnp.eye(N, dtype=jnp.float32)
        ew, w_k = _compute_edge_weights(a_sym)
    else:
        ew = jnp.eye(N, dtype=jnp.float32)
        w_k = ew

    kernel = functools.partial(propagate_kernel, n_channels=C, seq_len=T)

    # TODO(synk): for very large C*T (> a few MB per batch block) add a C-chunk
    # grid axis to bound VMEM; unnecessary at STGENet-scale shapes.
    y = pl.pallas_call(
        kernel,
        out_shape=jax.ShapeDtypeStruct((B, N, C * T), x.dtype),
        grid_spec=pltpu.PrefetchScalarGridSpec(
            num_scalar_prefetch=0,
            grid=(B,),
            in_specs=[
                pl.BlockSpec((N, N), lambda b: (0, 0)),        # W^K, constant
                pl.BlockSpec((1, C, N, T), lambda b: (b, 0, 0, 0)),
            ],
            out_specs=pl.BlockSpec((1, N, C * T), lambda b: (b, 0, 0)),
        ),
        compiler_params=pltpu.CompilerParams(
            dimension_semantics=("parallel",),   # disjoint output block per b
        ),
    )(w_k, x)

    return y, ew


if __name__ == "__main__":
    N = N_NODES
    key = jax.random.PRNGKey(0)
    k_adj, k_x, k_x2 = jax.random.split(key, 3)

    # deterministic synthetic adjacency; the learnable parameter is adj[xs, ys]
    adj = jax.random.uniform(k_adj, (N, N), dtype=jnp.float32)
    xs, ys = jnp.tril_indices(N, k=-1)
    edge_weight_param = adj[xs, ys]               # == nn.Parameter in the module

    def reference(x):
        a_lower = jnp.zeros((N, N), jnp.float32).at[xs, ys].set(edge_weight_param)
        a_sym = a_lower + a_lower.T + jnp.eye(N, dtype=jnp.float32)
        deg = a_sym.sum(axis=1)
        d_inv_sqrt = jnp.diag(deg ** -0.5)
        ew_ref = d_inv_sqrt @ a_sym @ d_inv_sqrt + jnp.eye(N, dtype=jnp.float32)
        B = x.shape[0]
        x_r = jnp.transpose(x, (0, 2, 1, 3)).reshape(B, N, -1)
        y_ref = x_r
        for _ in range(K_HOPS):
            y_ref = jnp.einsum("ij,bjf->bif", ew_ref, y_ref)
        return y_ref, ew_ref

    # primary shape: B=2, C=4, n_nodes=22, T=32  ->  output lane width C*T = 128
    x = jax.random.normal(k_x, (2, 4, N, 32), dtype=jnp.float32)
    y, ew = spatial_graph_forward(x, edge_weight_param)
    jax.block_until_ready((y, ew))
    y_ref, ew_ref = reference(x)
    np.testing.assert_allclose(np.asarray(ew), np.asarray(ew_ref), rtol=1e-4, atol=1e-4)
    np.testing.assert_allclose(np.asarray(y), np.asarray(y_ref), rtol=1e-4, atol=1e-4)

    # second shape: odd batch + narrow lane width (C*T = 96, masked-store path)
    x2 = jax.random.normal(k_x2, (3, 4, N, 24), dtype=jnp.float32)
    y2, ew2 = spatial_graph_forward(x2, edge_weight_param)
    jax.block_until_ready((y2, ew2))
    y2_ref, _ = reference(x2)
    np.testing.assert_allclose(np.asarray(y2), np.asarray(y2_ref), rtol=1e-4, atol=1e-4)

    # spatial_GCN=False path: edge_weight = I, propagation reduces to the permute
    y3, ew3 = spatial_graph_forward(x, edge_weight_param, spatial_GCN=False)
    jax.block_until_ready((y3, ew3))
    x_perm = jnp.transpose(x, (0, 2, 1, 3)).reshape(x.shape[0], N, -1)
    np.testing.assert_allclose(np.asarray(ew3), np.asarray(jnp.eye(N)), rtol=1e-6, atol=1e-6)
    np.testing.assert_allclose(np.asarray(y3), np.asarray(x_perm), rtol=1e-4, atol=1e-4)

    print("KERNEL_OK")
</pallas_src>

<mosaic_0001>
module attributes {stable_mosaic.version = 11 : i64} {
  func.func @edge_weight_kernel(%arg0: memref<22x22xf32, #tpu.memory_space<vmem>>, %arg1: memref<22x22xf32, #tpu.memory_space<vmem>>, %arg2: memref<22x22xf32, #tpu.memory_space<vmem>>) attributes {dimension_semantics = [], scalar_prefetch = 0 : i64, scratch_operands = 0 : i64, tpu.core_type = #tpu.core_type<tc>} {
    %c0 = arith.constant 0 : index
    %c0_0 = arith.constant 0 : index
    %0 = vector.load %arg0[%c0, %c0_0] : memref<22x22xf32, #tpu.memory_space<vmem>>, vector<22x22xf32>
    %cst = arith.constant dense<0.000000e+00> : vector<22xf32>
    %1 = vector.multi_reduction <add>, %0, %cst [1] : vector<22x22xf32> to vector<22xf32>
    %2 = vector.shape_cast %1 : vector<22xf32> to vector<22x1xf32>
    %cst_1 = arith.constant dense<0.000000e+00> : vector<22xf32>
    %3 = vector.multi_reduction <add>, %0, %cst_1 [0] : vector<22x22xf32> to vector<22xf32>
    %4 = vector.shape_cast %3 : vector<22xf32> to vector<1x22xf32>
    %5 = math.rsqrt %2 : vector<22x1xf32>
    %6 = vector.broadcast %5 : vector<22x1xf32> to vector<22x22xf32>
    %7 = arith.mulf %6, %0 : vector<22x22xf32>
    %8 = math.rsqrt %4 : vector<1x22xf32>
    %9 = vector.broadcast %8 : vector<1x22xf32> to vector<22x22xf32>
    %10 = arith.mulf %7, %9 : vector<22x22xf32>
    %11 = tpu.iota {dimensions = array<i32: 0>} : vector<22x22xi32>
    %12 = tpu.iota {dimensions = array<i32: 1>} : vector<22x22xi32>
    %c0_i32 = arith.constant 0 : i32
    %13 = vector.broadcast %c0_i32 : i32 to vector<22x22xi32>
    %14 = arith.addi %11, %13 : vector<22x22xi32>
    %15 = arith.cmpi eq, %14, %12 : vector<22x22xi32>
    %16 = arith.extui %15 : vector<22x22xi1> to vector<22x22xi32>
    %17 = arith.sitofp %16 : vector<22x22xi32> to vector<22x22xf32>
    %18 = arith.addf %10, %17 : vector<22x22xf32>
    %c0_2 = arith.constant 0 : index
    %c0_3 = arith.constant 0 : index
    %19 = vector.load %arg1[%c0_2, %c0_3] : memref<22x22xf32, #tpu.memory_space<vmem>>, vector<22x22xf32>
    tpu.vector_store %arg1[%c0_2, %c0_3], %18 {strides = array<i32>} : memref<22x22xf32, #tpu.memory_space<vmem>>, vector<22x22xf32>,
    %cst_4 = arith.constant dense<0.000000e+00> : vector<22x22xf32>
    %20 = tpu.matmul %18, %18, %cst_4 {dimension_numbers = #tpu.dot_dimension_numbers<[1], [0], [0], [1], [0, 0, 1, 1], [], []>} : vector<22x22xf32>, vector<22x22xf32>, vector<22x22xf32> -> vector<22x22xf32>
    %c0_5 = arith.constant 0 : index
    %c0_6 = arith.constant 0 : index
    %21 = vector.load %arg2[%c0_5, %c0_6] : memref<22x22xf32, #tpu.memory_space<vmem>>, vector<22x22xf32>
    tpu.vector_store %arg2[%c0_5, %c0_6], %20 {strides = array<i32>} : memref<22x22xf32, #tpu.memory_space<vmem>>, vector<22x22xf32>,
    return
  }
}

</mosaic_0001>

<llo_original>
// kernel: tpu_custom_call.1
$region0: #{tpu_custom_call.1}
  #allocation0 [shape = 'u32[]', space=smem, size = 0x4, offset = 0x4, fixed_abs, tag = 'smem constant byte address 0x4 - core index']
  #allocation1 [shape = 'u32[144,128]{1,0:T(1,128)}', space=vmem, size = 0x12000, scoped, tag = 'internal scratch']
  %s0 = inlined_call_operand.hbm [shape: f32[22,22], index: 0, kind: input, shape index: {}]
  %s1 = inlined_call_operand.hbm [shape: f32[22,22], index: 1, kind: output, shape index: {0}]
  %s2 = inlined_call_operand.hbm [shape: f32[22,22], index: 2, kind: output, shape index: {1}]
  %3 = xla_tuple %s1, %s2
  %s4 = sld [smem:[#allocation0]]
  $region26: #{tpu_custom_call.1} parent=0
    _
  %s6 = ssub.s32 1, %s4
  %s7 = scalar_select 0, %s6, %s4
  $region1: #{tpu_custom_call.1} parent=0
    #allocation2 [shape = 'u8[12288]{0}', space=vmem, size = 0x3000, scoped, tag = 'input window, operand 0, single buffered']
    #allocation3 [shape = 's32[1]{0}', space=sflag, size = 0x4, scoped, tag = 'scoped memory for tpu_custom_call.1']
    #allocation4 [shape = 's32[1]{0}', space=sflag, size = 0x4, scoped, tag = 'scoped memory for tpu_custom_call.1']
    #allocation5 [shape = 'u8[12288]{0}', space=vmem, size = 0x3000, scoped, tag = 'output window, operand 0, single buffered']
    #allocation6 [shape = 'u8[12288]{0}', space=vmem, size = 0x3000, scoped, tag = 'output window, operand 1, single buffered']
    #allocation7 [shape = 's32[1]{0}', space=sflag, size = 0x4, scoped, tag = 'scoped memory for tpu_custom_call.1']
    %8 = vsyncpa [#allocation3], 0
    %9 = vsyncpa [#allocation4], 0
    %10 = vsyncpa [#allocation7], 0
    // Predicated region
    $region2: #{tpu_custom_call.1} parent=1 // pred_check
      _
    $region3: #{tpu_custom_call.1} parent=1 // pred_check_branch
      %12 = sbr.rel (0) target = $region5
    $region4: #{tpu_custom_call.1} parent=1 // pred_region
      %s14 = ssub.s32 384, 384
      %15 = vsyncadd [#allocation3], %s14
      %s16 = sshll.u32 [#allocation2], 4
      %s17 = int_to_ptr.vmem [resolvable:$true] %s16
      %22 = dma.hbm_to_vmem [thread:$0]  %s0, 384, %s17, [#allocation3], 128, 128, 8
    $region5: #{tpu_custom_call.1} parent=1 // pred_fallthru
      _
    // Predicated region
    $region6: #{tpu_custom_call.1} parent=1 // pred_check
      _
    $region7: #{tpu_custom_call.1} parent=1 // pred_check_branch
      %24 = sbr.rel (0) target = $region9
    $region8: #{tpu_custom_call.1} parent=1 // pred_region
      %25 = dma.done [#allocation3], 384
    $region9: #{tpu_custom_call.1} parent=1 // pred_fallthru
      _
    %v26 = vld [vmem:[#allocation2] sm:$0xff]
    %v27 = vld [vmem:[#allocation2 + $0x8] sm:$0xff]
    %v28 = vld [vmem:[#allocation2 + $0x10] sm:$0x3f]
    %vm29 = vcmask 179200
    %v30 = vsel %vm29, %v26, 0.0
    %31 = vadd.xlane.f32.xlu0 %v30
    %v32 = vpop.xlane.xlu0 %31
    %v33 = vsel %vm29, %v27, 0.0
    %34 = vadd.xlane.f32.xlu0 %v33
    %v35 = vpop.xlane.xlu0 %34
    %vm36 = vcmask 177152
    %v37 = vsel %vm36, %v28, 0.0
    %38 = vadd.xlane.f32.xlu0 %v37
    %v39 = vpop.xlane.xlu0 %38
    %v40 = vadd.f32 %v30, %v33
    %v41 = vadd.f32 %v40, %v37
    %v42 = vrot.slane %v41, 4
    %v43 = vadd.f32 %v41, %v42
    %v44 = vrot.slane %v43, 2
    %v45 = vadd.f32 %v43, %v44
    %v46 = vrot.slane %v45, 1
    %v47 = vadd.f32 %v45, %v46
    %v48 = vrsqrt.pop %v32
    %v49 = vrsqrt.pop %v35
    %v50 = vrsqrt.pop %v39
    %v51 = vmul.f32 %v48, %v26
    %v52 = vmul.f32 %v49, %v27
    %v53 = vmul.f32 %v50, %v28
    %v54 = vrsqrt.pop %v47
    %v55 = vmul.f32 %v51, %v54
    %v56 = vmul.f32 %v52, %v54
    %v57 = vmul.f32 %v53, %v54
    %v58 = vlaneseq
    %v59 = vshrl.u32 %v58, 7
    %v60 = vadd.s32 %v59, 8
    %v61 = vadd.s32 %v59, 16
    %v62 = vlaneseq
    %v63 = vand.u32 %v62, 127
    %vm64 = vcmp.eq.s32.totalorder %v59, %v63
    %vm65 = vcmp.eq.s32.totalorder %v60, %v63
    %vm66 = vcmp.eq.s32.totalorder %v61, %v63
    %v67 = vsel %vm64, 1, 0
    %v68 = vsel %vm65, 1, 0
    %v69 = vsel %vm66, 1, 0
    %v70 = vcvt.s32.f32 %v67
    %v71 = vcvt.s32.f32 %v68
    %v72 = vcvt.s32.f32 %v69
    %v73 = vadd.f32 %v55, %v70
    %v74 = vadd.f32 %v56, %v71
    %v75 = vadd.f32 %v57, %v72
    %76 = vst.msk [vmem:[#allocation5] sm:$0xff] %vm29, %v73
    %77 = vst.msk [vmem:[#allocation5 + $0x8] sm:$0xff] %vm29, %v74
    %78 = vst.msk [vmem:[#allocation5 + $0x10] sm:$0x3f] %vm36, %v75
    %v80 = vsel %vm29, %v73, 0
    %v83 = vsel %vm29, %v74, 0
    %v86 = vsel %vm29, %v75, 0
    %vm88 = vcmask 1045504
    %v89 = vsel %vm88, %v75, 0
    %91 = vmatprep.subr.mxu0 0.0
    %92 = vmatpush1.msra.mxu0 %v73
    %93 = vmatprep.subr.mxu0 0.0
    %94 = vmatpush1.msra.mxu0 %v74
    %95 = vmatprep.subr.mxu0 0.0
    %96 = vmatpush1.msra.mxu0 %v89
    %97 = vmatprep.subr.mxu0 0.0
    %98 = vmatpush1.msra.mxu0 0.0
    %99 = vmatprep.subr.mxu0 0.0
    %100 = vmatpush1.msra.mxu0 0.0
    %101 = vmatprep.subr.mxu0 0.0
    %102 = vmatpush1.msra.mxu0 0.0
    %103 = vmatprep.subr.mxu0 0.0
    %104 = vmatpush1.msra.mxu0 0.0
    %105 = vmatprep.subr.mxu0 0.0
    %106 = vmatpush1.msra.mxu0 0.0
    %107 = vmatprep.subr.mxu0 0.0
    %108 = vmatpush1.msra.mxu0 0.0
    %109 = vmatprep.subr.mxu0 0.0
    %110 = vmatpush1.msra.mxu0 0.0
    %111 = vmatprep.subr.mxu0 0.0
    %112 = vmatpush1.msra.mxu0 0.0
    %113 = vmatprep.subr.mxu0 0.0
    %114 = vmatpush1.msra.mxu0 0.0
    %115 = vmatprep.subr.mxu0 0.0
    %116 = vmatpush1.msra.mxu0 0.0
    %117 = vmatprep.subr.mxu0 0.0
    %118 = vmatpush1.msra.mxu0 0.0
    %119 = vmatprep.subr.mxu0 0.0
    %120 = vmatpush1.msra.mxu0 0.0
    %121 = vmatprep.subr.mxu0 0.0
    %122 = vmatpush1.msra.mxu0 0.0
    %123 = vmatprep.subr.mxu0 0.0
    %124 = vmatpush1.msra.mxu0 0.0
    %125 = vmatprep.subr.mxu0 0.0
    %126 = vmatpush1.msra.mxu0 0.0
    %127 = vmatprep.subr.mxu0 0.0
    %128 = vmatpush1.msra.mxu0 0.0
    %129 = vmatprep.subr.mxu0 0.0
    %130 = vmatpush1.msra.mxu0 0.0
    %131 = vmatprep.subr.mxu0 0.0
    %132 = vmatpush1.msra.mxu0 0.0
    %133 = vmatprep.subr.mxu0 0.0
    %134 = vmatpush1.msra.mxu0 0.0
    %135 = vmatprep.subr.mxu0 0.0
    %136 = vmatpush1.msra.mxu0 0.0
    %137 = vmatprep.subr.mxu0 0.0
    %138 = vmatpush1.msra.mxu0 0.0
    %139 = vmatprep.subr.mxu0 0.0
    %140 = vmatpush1.msra.mxu0 0.0
    %141 = vmatprep.subr.mxu0 0.0
    %142 = vmatpush1.msra.mxu0 0.0
    %143 = vmatprep.subr.mxu0 0.0
    %144 = vmatpush1.msra.mxu0 0.0
    %145 = vmatprep.subr.mxu0 0.0
    %146 = vmatpush1.msra.mxu0 0.0
    %147 = vmatprep.subr.mxu0 0.0
    %148 = vmatpush1.msra.mxu0 0.0
    %149 = vmatprep.subr.mxu0 0.0
    %150 = vmatpush1.msra.mxu0 0.0
    %151 = vmatprep.subr.mxu0 0.0
    %152 = vmatpush1.msra.mxu0 0.0
    %153 = vmatprep.subr.mxu0 0.0
    %154 = vmatpush1.msra.mxu0 0.0
    %155 = vmatprep.mubr.f32.mxu0 0.0
    %156 = vmatmul.mubr.f32.gmra.mrb[0].mxu0 %v80
    %v157 = vpop.f32.mrb[0].mxu0
    %v158 = vadd.f32 0.0, %v157
    %v159 = vpop.f32.mrb[0].mxu0
    %160 = vmatprep.mubr.f32.mxu0 0.0
    %161 = vmatmul.mubr.f32.gmra.mrb[0].mxu0 %v83
    %v162 = vpop.f32.mrb[0].mxu0
    %v163 = vadd.f32 0.0, %v162
    %v164 = vpop.f32.mrb[0].mxu0
    %165 = vmatprep.mubr.f32.mxu0 0.0
    %166 = vmatmul.mubr.f32.gmra.mrb[0].mxu0 %v86
    %v167 = vpop.f32.mrb[0].mxu0
    %v168 = vadd.f32 0.0, %v167
    %v169 = vpop.f32.mrb[0].mxu0
    %170 = vdwg.mxu0
    %171 = vst.msk [vmem:[#allocation6] sm:$0xff] %vm29, %v158
    %172 = vst.msk [vmem:[#allocation6 + $0x8] sm:$0xff] %vm29, %v163
    %173 = vst.msk [vmem:[#allocation6 + $0x10] sm:$0x3f] %vm36, %v168
    // Predicated region
    $region10: #{tpu_custom_call.1} parent=1 // pred_check
      _
    $region11: #{tpu_custom_call.1} parent=1 // pred_check_branch
      %175 = sbr.rel (0) target = $region13
    $region12: #{tpu_custom_call.1} parent=1 // pred_region
      %s177 = ssub.s32 384, 384
      %178 = vsyncadd [#allocation4], %s177
      %s179 = sshll.u32 [#allocation5], 4
      %s180 = int_to_ptr.vmem [resolvable:$true] %s179
      %185 = dma.vmem_to_hbm [thread:$0]  %s180, 384, %s1, [#allocation4], 128, 128, 8
    $region13: #{tpu_custom_call.1} parent=1 // pred_fallthru
      _
    // Predicated region
    $region14: #{tpu_custom_call.1} parent=1 // pred_check
      _
    $region15: #{tpu_custom_call.1} parent=1 // pred_check_branch
      %187 = sbr.rel (0) target = $region17
    $region16: #{tpu_custom_call.1} parent=1 // pred_region
      %s189 = ssub.s32 384, 384
      %190 = vsyncadd [#allocation7], %s189
      %s191 = sshll.u32 [#allocation6], 4
      %s192 = int_to_ptr.vmem [resolvable:$true] %s191
      %197 = dma.vmem_to_hbm [thread:$0]  %s192, 384, %s2, [#allocation7], 128, 128, 8
    $region17: #{tpu_custom_call.1} parent=1 // pred_fallthru
      _
    // Predicated region
    $region18: #{tpu_custom_call.1} parent=1 // pred_check
      _
    $region19: #{tpu_custom_call.1} parent=1 // pred_check_branch
      %199 = sbr.rel (0) target = $region21
    $region20: #{tpu_custom_call.1} parent=1 // pred_region
      %200 = dma.done [#allocation4], 384
    $region21: #{tpu_custom_call.1} parent=1 // pred_fallthru
      _
    // Predicated region
    $region22: #{tpu_custom_call.1} parent=1 // pred_check
      _
    $region23: #{tpu_custom_call.1} parent=1 // pred_check_branch
      %202 = sbr.rel (0) target = $region25
    $region24: #{tpu_custom_call.1} parent=1 // pred_region
      %203 = dma.done [#allocation7], 384
    $region25: #{tpu_custom_call.1} parent=1 // pred_fallthru
      _
    %204 = vsyncpa [#allocation3], 1
    %205 = vsyncpa [#allocation4], 1
    %206 = vsyncpa [#allocation7], 1

</llo_original>
